<compile_context>
chip_gen: v7x
topology: tpu7x:2x2x1
jax: 0.10.0
libtpu: 0.0.40
codegen_flags: <defaults>
</compile_context>

<pallas_src>
import jax
import jax.numpy as jnp
from jax.experimental import pallas as pl
from jax.experimental.pallas import tpu as pltpu


def squeeze_channels(x):
    """Recommended production path: metadata-only squeeze (free in XLA)."""
    assert x.ndim == 3 and x.shape[2] == 1, "expects (B, C, 1)"
    return jnp.squeeze(x, axis=2)


def _copy_kernel(x_ref, o_ref):
    # Pure lane-dense VMEM copy.
    # TODO(synk): fuse the downstream consumer (next matmul / activation) here;
    # a standalone copy can never beat the metadata-only reshape.
    o_ref[...] = x_ref[...]


_TARGET_BLOCK_BYTES = 2 * 1024 * 1024   # ~2 MiB/block; 2 arrays x 2 buffers ≈ 8 MiB live
_VMEM_LIMIT_BYTES = 32 * 1024 * 1024    # safe on v5e (16 MiB default too low for big C)


def _copy_2d(x2):
    """Tiled, lane-dense Pallas copy of a 2D array (rows tiled, full lane extent)."""
    R, L = x2.shape
    itemsize = x2.dtype.itemsize
    row_bytes = max(L * itemsize, 1)

    # Rows per block sized by bytes; either full extent or a multiple of 8 so the
    # (8, 128)-or-full-dim BlockSpec rule is satisfied (L is full extent always).
    tb = max(1, _TARGET_BLOCK_BYTES // row_bytes)
    if tb >= R:
        tb = R
    else:
        tb = max(8, (tb // 8) * 8)

    grid = (pl.cdiv(R, tb),)
    nbytes = R * L * itemsize

    return pl.pallas_call(
        _copy_kernel,
        out_shape=jax.ShapeDtypeStruct((R, L), x2.dtype),
        grid=grid,
        in_specs=[pl.BlockSpec((tb, L), lambda i: (i, 0))],
        out_specs=pl.BlockSpec((tb, L), lambda i: (i, 0)),
        compiler_params=pltpu.CompilerParams(
            dimension_semantics=("parallel",),      # shards across v7x's 2 TCs
            vmem_limit_bytes=_VMEM_LIMIT_BYTES,
        ),
        cost_estimate=pl.CostEstimate(
            flops=0, transcendentals=0, bytes_accessed=2 * nbytes
        ),
    )(x2)


def squeeze_channels_pallas(x):
    """Pallas equivalent of torch `x.squeeze(2)` for a (B, C, 1) tensor.

    Only useful as a fusion point for later real compute; on its own the
    metadata-only `squeeze_channels` above is strictly faster.
    """
    assert x.ndim == 3 and x.shape[2] == 1, "expects (B, C, 1)"
    B, C, _ = x.shape

    # Metadata-only squeeze (contiguous trailing unit dim) done wrapper-side so the
    # kernel + DMA only ever see lane-dense 2D data.
    x2 = x.reshape(B, C)
    total = B * C

    # Prefer a flat lane-dense slab: last dim a large multiple of 128 fills all
    # lanes/sublanes and avoids masked partial stores when C is small / not %128.
    lane = None
    for cand in (4096, 2048, 1024, 512, 256, 128):
        if total % cand == 0:
            lane = cand
            break

    if lane is not None:
        flat = x2.reshape(total // lane, lane)      # metadata-only for contiguous data
        return _copy_2d(flat).reshape(B, C)

    # Fallback: keep C (full extent) on the lane axis, tile over B.
    return _copy_2d(x2)


def _check(B, C, dtype=jnp.float32, key=None):
    key = jax.random.PRNGKey(0) if key is None else key
    x = jax.random.normal(key, (B, C, 1), dtype=dtype)
    ref = jnp.squeeze(x, axis=2)
    out = jax.block_until_ready(squeeze_channels_pallas(x))
    assert out.shape == (B, C), out.shape
    assert out.dtype == x.dtype
    assert jnp.array_equal(out, ref)
    # Production path stays bit-identical too.
    assert jnp.array_equal(jax.block_until_ready(squeeze_channels(x)), ref)


if __name__ == "__main__":
    # Primary small shape consistent with the module: (batch, channels, 1).
    _check(2, 4)
    # Odd, non-%128 shape -> 2D fallback path.
    _check(33, 7)
    # Larger shape -> flat lane-dense slab path with a tiled grid.
    _check(2048, 1024)

    print("KERNEL_OK")
</pallas_src>

<mosaic_0001>
module attributes {stable_mosaic.version = 11 : i64} {
  func.func @_copy_kernel(%arg0: i32, %arg1: memref<2x4xf32, #tpu.memory_space<vmem>>, %arg2: memref<2x4xf32, #tpu.memory_space<vmem>>) attributes {dimension_semantics = [#tpu.dimension_semantics<parallel>], iteration_bounds = array<i64: 1>, scalar_prefetch = 0 : i64, scratch_operands = 0 : i64, tpu.core_type = #tpu.core_type<tc>, window_params = [{transform_indices = @transform_0, window_bounds = array<i64: 2, 4>}, {transform_indices = @transform_1, window_bounds = array<i64: 2, 4>}]} {
    %c0 = arith.constant 0 : index
    %c0_0 = arith.constant 0 : index
    %0 = vector.load %arg1[%c0, %c0_0] : memref<2x4xf32, #tpu.memory_space<vmem>>, vector<2x4xf32>
    %c0_1 = arith.constant 0 : index
    %c0_2 = arith.constant 0 : index
    %1 = vector.load %arg2[%c0_1, %c0_2] : memref<2x4xf32, #tpu.memory_space<vmem>>, vector<2x4xf32>
    tpu.vector_store %arg2[%c0_1, %c0_2], %0 {strides = array<i32>} : memref<2x4xf32, #tpu.memory_space<vmem>>, vector<2x4xf32>,
    return
  }
  func.func @transform_0(%arg0: i32) -> (i32, i32) {
    %c0_i32 = arith.constant 0 : i32
    %c0_i32_0 = arith.constant 0 : i32
    return %arg0, %c0_i32 : i32, i32
  }
  func.func @transform_1(%arg0: i32) -> (i32, i32) {
    %c0_i32 = arith.constant 0 : i32
    %c0_i32_0 = arith.constant 0 : i32
    return %arg0, %c0_i32 : i32, i32
  }
}

</mosaic_0001>

<llo_original>
// kernel: tpu_custom_call.1
$region0: #{tpu_custom_call.1}
  #allocation0 [shape = 'u32[]', space=smem, size = 0x4, offset = 0x4, fixed_abs, tag = 'smem constant byte address 0x4 - core index']
  #allocation1 [shape = 'u32[144,128]{1,0:T(1,128)}', space=vmem, size = 0x12000, scoped, tag = 'internal scratch']
  %s0 = inlined_call_operand.hbm [shape: f32[2,4], index: 0, kind: input, shape index: {}]
  %s1 = inlined_call_operand.hbm [shape: f32[2,4], index: 1, kind: output, shape index: {}]
  %s2 = sld [smem:[#allocation0]]
  $region18: #{tpu_custom_call.1} parent=0
    _
  %s4 = ssub.s32 1, %s2
  %s5 = scalar_select 0, %s4, %s2
  $region1: #{tpu_custom_call.1} parent=0
    #allocation2 [shape = 'u8[1024]{0}', space=vmem, size = 0x400, scoped, tag = 'input window, operand 0, single buffered']
    #allocation3 [shape = 's32[1]{0}', space=sflag, size = 0x4, scoped, tag = 'scoped memory for tpu_custom_call.1']
    #allocation4 [shape = 's32[1]{0}', space=sflag, size = 0x4, scoped, tag = 'scoped memory for tpu_custom_call.1']
    #allocation5 [shape = 'u8[1024]{0}', space=vmem, size = 0x400, scoped, tag = 'output window, operand 0, single buffered']
    %6 = vsyncpa [#allocation3], 0
    %7 = vsyncpa [#allocation4], 0
    // Predicated region
    $region2: #{tpu_custom_call.1} parent=1 // pred_check
      _
    $region3: #{tpu_custom_call.1} parent=1 // pred_check_branch
      %9 = sbr.rel (0) target = $region5
    $region4: #{tpu_custom_call.1} parent=1 // pred_region
      %s11 = ssub.s32 32, 32
      %12 = vsyncadd [#allocation3], %s11
      %s14 = sshll.u32 [#allocation2], 4
      %s15 = int_to_ptr.vmem [resolvable:$true] %s14
      %17 = dma.hbm_to_vmem [thread:$0]  %s0, 32, %s15, [#allocation3]
    $region5: #{tpu_custom_call.1} parent=1 // pred_fallthru
      _
    // Predicated region
    $region6: #{tpu_custom_call.1} parent=1 // pred_check
      _
    $region7: #{tpu_custom_call.1} parent=1 // pred_check_branch
      %19 = sbr.rel (0) target = $region9
    $region8: #{tpu_custom_call.1} parent=1 // pred_region
      %20 = dma.done [#allocation3], 32
    $region9: #{tpu_custom_call.1} parent=1 // pred_fallthru
      _
    %v21 = vld [vmem:[#allocation2] sm:$0x3]
    %vm22 = vcmask 25600
    %23 = vst.msk [vmem:[#allocation5] sm:$0x3] %vm22, %v21
    // Predicated region
    $region10: #{tpu_custom_call.1} parent=1 // pred_check
      _
    $region11: #{tpu_custom_call.1} parent=1 // pred_check_branch
      %25 = sbr.rel (0) target = $region13
    $region12: #{tpu_custom_call.1} parent=1 // pred_region
      %s27 = ssub.s32 32, 32
      %28 = vsyncadd [#allocation4], %s27
      %s30 = sshll.u32 [#allocation5], 4
      %s31 = int_to_ptr.vmem [resolvable:$true] %s30
      %33 = dma.vmem_to_hbm [thread:$0]  %s31, 32, %s1, [#allocation4]
    $region13: #{tpu_custom_call.1} parent=1 // pred_fallthru
      _
    // Predicated region
    $region14: #{tpu_custom_call.1} parent=1 // pred_check
      _
    $region15: #{tpu_custom_call.1} parent=1 // pred_check_branch
      %35 = sbr.rel (0) target = $region17
    $region16: #{tpu_custom_call.1} parent=1 // pred_region
      %36 = dma.done [#allocation4], 32
    $region17: #{tpu_custom_call.1} parent=1 // pred_fallthru
      _
    %37 = vsyncpa [#allocation3], 1
    %38 = vsyncpa [#allocation4], 1

</llo_original>
